<compile_context>
chip_gen: v7x
topology: tpu7x:2x2x1
jax: 0.10.0
libtpu: 0.0.40
codegen_flags: <defaults>
</compile_context>

<pallas_src>
import jax
import jax.numpy as jnp
from jax.experimental import pallas as pl
from jax.experimental.pallas import tpu as pltpu

ACTIVATION_EXP_WIDTH = 3.0
ACTIVATION_MANTISSA_WIDTH = 4.0
CONST_EXP_ZERO_SHIFT = 3.0
EPS = 1e-5

_EXP_MAX = 2.0 ** ACTIVATION_EXP_WIDTH - 1.0            # 7
_MANT_MAX = 2.0 ** ACTIVATION_MANTISSA_WIDTH - 1.0      # 15
# exp - exp_zero_shift + mantissa_width = exp + 1  (with the module constants)
_SCALE_BIAS = int(ACTIVATION_MANTISSA_WIDTH - CONST_EXP_ZERO_SHIFT)  # = 1

_LANES = 512          # lane-dense last dim (multiple of 128)
_MAX_BLOCK_ROWS = 512 # 512 x 512 x 4 B = 1 MiB f32 block


def _quantize_kernel(x_ref, o_ref):
    # intuiuts_quantize_activation (clip_only=False path)
    x = x_ref[...].astype(jnp.float32)
    value = jnp.abs(x) + EPS
    exp = jnp.floor(
        jnp.clip(-jnp.log2(value) + CONST_EXP_ZERO_SHIFT, 0.0, _EXP_MAX)
    )
    exp_i = exp.astype(jnp.int32)  # integer in [0, 7]

    # scale = 2**(exp - exp_zero_shift + mantissa_width) = 2**(exp + 1)
    # inv_scale = 2**(-(exp + 1)); both are exact powers of two, so build the
    # float32 bit pattern directly ((e + 127) << 23) instead of using exp2.
    scale = pltpu.bitcast((exp_i + (_SCALE_BIAS + 127)) << 23, jnp.float32)
    inv_scale = pltpu.bitcast((127 - _SCALE_BIAS - exp_i) << 23, jnp.float32)

    mant = jnp.round(x * scale)                 # ties-to-even, same as torch.round
    mant = jnp.clip(mant, -_MANT_MAX, _MANT_MAX)
    o_ref[...] = mant * inv_scale


def _clip_kernel(x_ref, o_ref):
    # intuitus_clip_activation (clip_only=True path)
    x = x_ref[...].astype(jnp.float32)
    q_min = 2.0 ** (
        -(2.0 ** ACTIVATION_EXP_WIDTH - 1.0)
        - ACTIVATION_MANTISSA_WIDTH
        + CONST_EXP_ZERO_SHIFT
    )
    q_max = (2.0 ** ACTIVATION_MANTISSA_WIDTH - 1.0) * 2.0 ** (
        -ACTIVATION_MANTISSA_WIDTH + CONST_EXP_ZERO_SHIFT
    )
    absx = jnp.abs(x)
    clipped = jnp.clip(absx, q_min, q_max)
    clipped = jnp.where(absx < q_min / 2.0, 0.0, clipped)
    o_ref[...] = clipped * jnp.sign(x)


def _round_up(a, b):
    return (a + b - 1) // b * b


def activation_quantize(x, clip_only=False):
    """Elementwise intuitus activation quantization.  x: any shape (e.g. NCHW).

    Output is float32 (module casts to DTYPE=float32)."""
    orig_shape = x.shape
    flat = x.reshape(-1)               # no dtype cast: kernel casts internally
    n = flat.shape[0]

    lanes = _LANES if n >= _LANES else 128
    rows_needed = -(-n // lanes)
    block_rows = min(_MAX_BLOCK_ROWS, _round_up(rows_needed, 8))
    rows = _round_up(rows_needed, block_rows)
    n_pad = rows * lanes

    padded = n_pad != n
    if padded:
        # pad with 1.0 (harmless finite value) so log2 stays well-defined
        flat = jnp.concatenate(
            [flat, jnp.ones((n_pad - n,), dtype=flat.dtype)]
        )

    slab = flat.reshape(rows, lanes)
    kernel = _clip_kernel if clip_only else _quantize_kernel
    grid = (rows // block_rows,)

    out = pl.pallas_call(
        kernel,
        out_shape=jax.ShapeDtypeStruct((rows, lanes), jnp.float32),
        grid_spec=pltpu.PrefetchScalarGridSpec(
            num_scalar_prefetch=0,
            grid=grid,
            in_specs=[pl.BlockSpec((block_rows, lanes), lambda i: (i, 0))],
            out_specs=pl.BlockSpec((block_rows, lanes), lambda i: (i, 0)),
        ),
        compiler_params=pltpu.CompilerParams(
            dimension_semantics=("parallel",)
        ),
    )(slab)

    if padded:
        return out.reshape(-1)[:n].reshape(orig_shape)
    return out.reshape(orig_shape)


# ---------------------------------------------------------------------------
# Pure-JAX references mirroring the PyTorch math, for verification.
# ---------------------------------------------------------------------------
def _reference_quantize(x):
    x = x.astype(jnp.float32)
    value = jnp.abs(x) + EPS
    exp = jnp.floor(
        jnp.clip(-jnp.log2(value) + CONST_EXP_ZERO_SHIFT, 0.0, _EXP_MAX)
    )
    mant = jnp.round(
        x * 2.0 ** (exp - CONST_EXP_ZERO_SHIFT + ACTIVATION_MANTISSA_WIDTH)
    )
    mant = jnp.clip(mant, -_MANT_MAX, _MANT_MAX)
    return mant * 2.0 ** (-exp + CONST_EXP_ZERO_SHIFT - ACTIVATION_MANTISSA_WIDTH)


def _reference_clip(x):
    x = x.astype(jnp.float32)
    q_min = 2.0 ** (
        -(2.0 ** ACTIVATION_EXP_WIDTH - 1.0)
        - ACTIVATION_MANTISSA_WIDTH
        + CONST_EXP_ZERO_SHIFT
    )
    q_max = (2.0 ** ACTIVATION_MANTISSA_WIDTH - 1.0) * 2.0 ** (
        -ACTIVATION_MANTISSA_WIDTH + CONST_EXP_ZERO_SHIFT
    )
    absx = jnp.abs(x)
    clipped = jnp.clip(absx, q_min, q_max)
    clipped = jnp.where(absx < q_min / 2.0, 0.0, clipped)
    return clipped * jnp.sign(x)


if __name__ == "__main__":
    key = jax.random.PRNGKey(0)
    # NCHW activation, small shapes
    x = jax.random.normal(key, (2, 4, 16, 16), dtype=jnp.float32) * 4.0

    out = jax.block_until_ready(activation_quantize(x, clip_only=False))
    ref = _reference_quantize(x)
    assert out.shape == x.shape and out.dtype == jnp.float32
    assert jnp.allclose(out, ref, atol=1e-6), "quantize mismatch vs reference"

    out_clip = jax.block_until_ready(activation_quantize(x, clip_only=True))
    ref_clip = _reference_clip(x)
    assert out_clip.shape == x.shape and out_clip.dtype == jnp.float32
    assert jnp.allclose(out_clip, ref_clip, atol=1e-6), "clip mismatch vs reference"

    print("KERNEL_OK")
</pallas_src>

<mosaic_0001>
module attributes {stable_mosaic.version = 11 : i64} {
  func.func @_quantize_kernel(%arg0: i32, %arg1: memref<8x512xf32, #tpu.memory_space<vmem>>, %arg2: memref<8x512xf32, #tpu.memory_space<vmem>>) attributes {dimension_semantics = [#tpu.dimension_semantics<parallel>], iteration_bounds = array<i64: 1>, scalar_prefetch = 0 : i64, scratch_operands = 0 : i64, tpu.core_type = #tpu.core_type<tc>, window_params = [{transform_indices = @transform_0, window_bounds = array<i64: 8, 512>}, {transform_indices = @transform_1, window_bounds = array<i64: 8, 512>}]} {
    %c0 = arith.constant 0 : index
    %c0_0 = arith.constant 0 : index
    %0 = vector.load %arg1[%c0, %c0_0] : memref<8x512xf32, #tpu.memory_space<vmem>>, vector<8x512xf32>
    %1 = math.absf %0 : vector<8x512xf32>
    %cst = arith.constant 9.99999974E-6 : f32
    %2 = vector.broadcast %cst : f32 to vector<8x512xf32>
    %3 = arith.addf %1, %2 : vector<8x512xf32>
    %4 = math.log %3 : vector<8x512xf32>
    %cst_1 = arith.constant 2.000000e+00 : f32
    %5 = math.log %cst_1 : f32
    %6 = vector.broadcast %5 : f32 to vector<8x512xf32>
    %7 = arith.divf %4, %6 : vector<8x512xf32>
    %cst_2 = arith.constant 0.000000e+00 : f32
    %8 = vector.broadcast %cst_2 : f32 to vector<8x512xf32>
    %9 = arith.subf %8, %7 : vector<8x512xf32>
    %cst_3 = arith.constant 3.000000e+00 : f32
    %10 = vector.broadcast %cst_3 : f32 to vector<8x512xf32>
    %11 = arith.addf %9, %10 : vector<8x512xf32>
    %cst_4 = arith.constant 0.000000e+00 : f32
    %cst_5 = arith.constant 7.000000e+00 : f32
    %12 = vector.broadcast %cst_4 : f32 to vector<8x512xf32>
    %13 = arith.maximumf %12, %11 : vector<8x512xf32>
    %14 = vector.broadcast %cst_5 : f32 to vector<8x512xf32>
    %15 = arith.minimumf %14, %13 : vector<8x512xf32>
    %16 = math.floor %15 : vector<8x512xf32>
    %17 = arith.fptosi %16 : vector<8x512xf32> to vector<8x512xi32>
    %c128_i32 = arith.constant 128 : i32
    %18 = vector.broadcast %c128_i32 : i32 to vector<8x512xi32>
    %19 = arith.addi %17, %18 : vector<8x512xi32>
    %c23_i32 = arith.constant 23 : i32
    %20 = vector.broadcast %c23_i32 : i32 to vector<8x512xi32>
    %21 = arith.shli %19, %20 : vector<8x512xi32>
    %22 = tpu.bitcast %21 : vector<8x512xi32> -> vector<8x512xf32>
    %c126_i32 = arith.constant 126 : i32
    %23 = vector.broadcast %c126_i32 : i32 to vector<8x512xi32>
    %24 = arith.subi %23, %17 : vector<8x512xi32>
    %c23_i32_6 = arith.constant 23 : i32
    %25 = vector.broadcast %c23_i32_6 : i32 to vector<8x512xi32>
    %26 = arith.shli %24, %25 : vector<8x512xi32>
    %27 = tpu.bitcast %26 : vector<8x512xi32> -> vector<8x512xf32>
    %28 = arith.mulf %0, %22 : vector<8x512xf32>
    %29 = math.roundeven %28 : vector<8x512xf32>
    %cst_7 = arith.constant -1.500000e+01 : f32
    %cst_8 = arith.constant 1.500000e+01 : f32
    %30 = vector.broadcast %cst_7 : f32 to vector<8x512xf32>
    %31 = arith.maximumf %30, %29 : vector<8x512xf32>
    %32 = vector.broadcast %cst_8 : f32 to vector<8x512xf32>
    %33 = arith.minimumf %32, %31 : vector<8x512xf32>
    %34 = arith.mulf %33, %27 : vector<8x512xf32>
    %c0_9 = arith.constant 0 : index
    %c0_10 = arith.constant 0 : index
    %35 = vector.load %arg2[%c0_9, %c0_10] : memref<8x512xf32, #tpu.memory_space<vmem>>, vector<8x512xf32>
    tpu.vector_store %arg2[%c0_9, %c0_10], %34 {strides = array<i32>} : memref<8x512xf32, #tpu.memory_space<vmem>>, vector<8x512xf32>,
    return
  }
  func.func @transform_0(%arg0: i32) -> (i32, i32) {
    %c0_i32 = arith.constant 0 : i32
    %c0_i32_0 = arith.constant 0 : i32
    return %arg0, %c0_i32 : i32, i32
  }
  func.func @transform_1(%arg0: i32) -> (i32, i32) {
    %c0_i32 = arith.constant 0 : i32
    %c0_i32_0 = arith.constant 0 : i32
    return %arg0, %c0_i32 : i32, i32
  }
}

</mosaic_0001>

<llo_original>
// kernel: tpu_custom_call.1
$region0: #{tpu_custom_call.1}
  #allocation0 [shape = 'u32[]', space=smem, size = 0x4, offset = 0x4, fixed_abs, tag = 'smem constant byte address 0x4 - core index']
  #allocation1 [shape = 'u32[144,128]{1,0:T(1,128)}', space=vmem, size = 0x12000, scoped, tag = 'internal scratch']
  %s0 = inlined_call_operand.hbm [shape: f32[8,512], index: 0, kind: input, shape index: {}]
  %s1 = inlined_call_operand.hbm [shape: f32[8,512], index: 1, kind: output, shape index: {}]
  %s2 = sld [smem:[#allocation0]]
  $region18: #{tpu_custom_call.1} parent=0
    _
  %s4 = ssub.s32 1, %s2
  %s5 = scalar_select 0, %s4, %s2
  $region1: #{tpu_custom_call.1} parent=0
    #allocation2 [shape = 'u8[16384]{0}', space=vmem, size = 0x4000, scoped, tag = 'input window, operand 0, single buffered']
    #allocation3 [shape = 's32[1]{0}', space=sflag, size = 0x4, scoped, tag = 'scoped memory for tpu_custom_call.1']
    #allocation4 [shape = 's32[1]{0}', space=sflag, size = 0x4, scoped, tag = 'scoped memory for tpu_custom_call.1']
    #allocation5 [shape = 'u8[16384]{0}', space=vmem, size = 0x4000, scoped, tag = 'output window, operand 0, single buffered']
    %6 = vsyncpa [#allocation3], 0
    %7 = vsyncpa [#allocation4], 0
    // Predicated region
    $region2: #{tpu_custom_call.1} parent=1 // pred_check
      _
    $region3: #{tpu_custom_call.1} parent=1 // pred_check_branch
      %9 = sbr.rel (0) target = $region5
    $region4: #{tpu_custom_call.1} parent=1 // pred_region
      %s11 = ssub.s32 512, 512
      %12 = vsyncadd [#allocation3], %s11
      %s14 = sshll.u32 [#allocation2], 4
      %s15 = int_to_ptr.vmem [resolvable:$true] %s14
      %17 = dma.hbm_to_vmem [thread:$0]  %s0, 512, %s15, [#allocation3]
    $region5: #{tpu_custom_call.1} parent=1 // pred_fallthru
      _
    // Predicated region
    $region6: #{tpu_custom_call.1} parent=1 // pred_check
      _
    $region7: #{tpu_custom_call.1} parent=1 // pred_check_branch
      %19 = sbr.rel (0) target = $region9
    $region8: #{tpu_custom_call.1} parent=1 // pred_region
      %20 = dma.done [#allocation3], 512
    $region9: #{tpu_custom_call.1} parent=1 // pred_fallthru
      _
    %v21 = vld [vmem:[#allocation2] sm:$0xff]
    %v22 = vld [vmem:[#allocation2 + $0x8] sm:$0xff]
    %v23 = vld [vmem:[#allocation2 + $0x10] sm:$0xff]
    %v24 = vld [vmem:[#allocation2 + $0x18] sm:$0xff]
    %v25 = vand.u32 2147483647, %v21
    %v26 = vand.u32 2147483647, %v22
    %v27 = vand.u32 2147483647, %v23
    %v28 = vand.u32 2147483647, %v24
    %v29 = vadd.f32 %v25, 1e-05
    %v30 = vadd.f32 %v26, 1e-05
    %v31 = vadd.f32 %v27, 1e-05
    %v32 = vadd.f32 %v28, 1e-05
    %v33 = vlog2.pop %v29
    %v34 = vmul.f32 %v33, 0.6931472
    %v35 = vlog2.pop %v30
    %v36 = vmul.f32 %v35, 0.6931472
    %v37 = vlog2.pop %v31
    %v38 = vmul.f32 %v37, 0.6931472
    %v39 = vlog2.pop %v32
    %v40 = vmul.f32 %v39, 0.6931472
    %v41 = vrcp.pop 0.6931472
    %v42 = vmul.f32 %v34, %v41
    %v43 = vmul.f32 %v36, %v41
    %v44 = vmul.f32 %v38, %v41
    %v45 = vmul.f32 %v40, %v41
    %v46 = vsub.f32 0.0, %v42
    %v47 = vsub.f32 0.0, %v43
    %v48 = vsub.f32 0.0, %v44
    %v49 = vsub.f32 0.0, %v45
    %v50 = vadd.f32 %v46, 3.0
    %v51 = vadd.f32 %v47, 3.0
    %v52 = vadd.f32 %v48, 3.0
    %v53 = vadd.f32 %v49, 3.0
    %v54 = vmax.f32 %v50, 0.0
    %v55 = vmax.f32 %v51, 0.0
    %v56 = vmax.f32 %v52, 0.0
    %v57 = vmax.f32 %v53, 0.0
    %v58 = vmin.f32 %v54, 7.0
    %v59 = vmin.f32 %v55, 7.0
    %v60 = vmin.f32 %v56, 7.0
    %v61 = vmin.f32 %v57, 7.0
    %v62 = vfloor.f32 %v58
    %v63 = vfloor.f32 %v59
    %v64 = vfloor.f32 %v60
    %v65 = vfloor.f32 %v61
    %v66 = vcvt.f32.s32.to.zero.pseudo %v62
    %v67 = vcvt.f32.s32.to.zero.pseudo %v63
    %v68 = vcvt.f32.s32.to.zero.pseudo %v64
    %v69 = vcvt.f32.s32.to.zero.pseudo %v65
    %v70 = vadd.s32 %v66, 128
    %v71 = vadd.s32 %v67, 128
    %v72 = vadd.s32 %v68, 128
    %v73 = vadd.s32 %v69, 128
    %v74 = vshll.u32 %v70, 23
    %v75 = vshll.u32 %v71, 23
    %v76 = vshll.u32 %v72, 23
    %v77 = vshll.u32 %v73, 23
    %v82 = vsub.s32 126, %v66
    %v83 = vsub.s32 126, %v67
    %v84 = vsub.s32 126, %v68
    %v85 = vsub.s32 126, %v69
    %v86 = vshll.u32 %v82, 23
    %v87 = vshll.u32 %v83, 23
    %v88 = vshll.u32 %v84, 23
    %v89 = vshll.u32 %v85, 23
    %v94 = vmul.f32 %v21, %v74
    %v95 = vmul.f32 %v22, %v75
    %v96 = vmul.f32 %v23, %v76
    %v97 = vmul.f32 %v24, %v77
    %v98 = vround.ne.pseudo %v94
    %v99 = vround.ne.pseudo %v95
    %v100 = vround.ne.pseudo %v96
    %v101 = vround.ne.pseudo %v97
    %v102 = vmax.f32 %v98, -15.0
    %v103 = vmax.f32 %v99, -15.0
    %v104 = vmax.f32 %v100, -15.0
    %v105 = vmax.f32 %v101, -15.0
    %v106 = vmin.f32 %v102, 15.0
    %v107 = vmin.f32 %v103, 15.0
    %v108 = vmin.f32 %v104, 15.0
    %v109 = vmin.f32 %v105, 15.0
    %v110 = vmul.f32 %v106, %v86
    %v111 = vmul.f32 %v107, %v87
    %v112 = vmul.f32 %v108, %v88
    %v113 = vmul.f32 %v109, %v89
    %114 = vst [vmem:[#allocation5] sm:$0xff] %v110
    %115 = vst [vmem:[#allocation5 + $0x8] sm:$0xff] %v111
    %116 = vst [vmem:[#allocation5 + $0x10] sm:$0xff] %v112
    %117 = vst [vmem:[#allocation5 + $0x18] sm:$0xff] %v113
    // Predicated region
    $region10: #{tpu_custom_call.1} parent=1 // pred_check
      _
    $region11: #{tpu_custom_call.1} parent=1 // pred_check_branch
      %119 = sbr.rel (0) target = $region13
    $region12: #{tpu_custom_call.1} parent=1 // pred_region
      %s121 = ssub.s32 512, 512
      %122 = vsyncadd [#allocation4], %s121
      %s124 = sshll.u32 [#allocation5], 4
      %s125 = int_to_ptr.vmem [resolvable:$true] %s124
      %127 = dma.vmem_to_hbm [thread:$0]  %s125, 512, %s1, [#allocation4]
    $region13: #{tpu_custom_call.1} parent=1 // pred_fallthru
      _
    // Predicated region
    $region14: #{tpu_custom_call.1} parent=1 // pred_check
      _
    $region15: #{tpu_custom_call.1} parent=1 // pred_check_branch
      %129 = sbr.rel (0) target = $region17
    $region16: #{tpu_custom_call.1} parent=1 // pred_region
      %130 = dma.done [#allocation4], 512
    $region17: #{tpu_custom_call.1} parent=1 // pred_fallthru
      _
    %131 = vsyncpa [#allocation3], 1
    %132 = vsyncpa [#allocation4], 1

</llo_original>
